<compile_context>
chip_gen: v7x
topology: tpu7x:2x2x1
jax: 0.10.0
libtpu: 0.0.40
codegen_flags: <defaults>
</compile_context>

<pallas_src>
import functools

import jax
import jax.numpy as jnp
from jax.experimental import pallas as pl
from jax.experimental.pallas import tpu as pltpu


def _round_up(x, m):
    return ((x + m - 1) // m) * m


# ----------------------------------------------------------------------------
# Pallas kernels
# ----------------------------------------------------------------------------
def _matmul_bias_kernel(x_ref, w_ref, b_ref, o_ref):
    """o = x @ w + b.  x: (tm, K), w: (K, tn), b: (1, tn).  f32 accumulate."""
    acc = jnp.dot(x_ref[...], w_ref[...], preferred_element_type=jnp.float32)
    o_ref[...] = (acc + b_ref[...]).astype(o_ref.dtype)


def _lstm_rec_kernel(gx_ref, whh_ref, h0_ref, c0_ref,
                     y_ref, hn_ref, cn_ref,
                     h_s, c_s, *, tc, hp, t_valid, compute_dtype):
    """Sequential LSTM recurrence over one time chunk of Tc steps.

    gx_ref : (B, Tc, 4*hp) f32   precomputed x@W_ih^T + b for this chunk
    whh_ref: (hp, 4*hp)          recurrent weights (compute dtype)
    h0/c0  : (B, hp) f32         initial state
    y_ref  : (B, Tc, hp)         per-step hidden output chunk
    hn/cn  : (B, hp) f32         final state (revisited block, written every chunk)
    h_s/c_s: (B, hp) f32 VMEM    carry across grid steps
    Gate g occupies lanes [g*hp, (g+1)*hp) -> all slices are 128-lane aligned.
    """
    c_idx = pl.program_id(0)

    @pl.when(c_idx == 0)
    def _():
        h_s[...] = h0_ref[...].astype(jnp.float32)
        c_s[...] = c0_ref[...].astype(jnp.float32)

    h = h_s[...]
    c = c_s[...]
    need_guard = (t_valid % tc) != 0           # static: padded tail steps exist?

    for tt in range(tc):                       # static (unrolled) in-chunk loop
        gates = gx_ref[:, tt, :] + jnp.dot(
            h.astype(compute_dtype), whh_ref[...],
            preferred_element_type=jnp.float32)          # (B, 4*hp) f32
        i_g = jax.nn.sigmoid(gates[:, 0 * hp:1 * hp])
        f_g = jax.nn.sigmoid(gates[:, 1 * hp:2 * hp])
        g_g = jnp.tanh(gates[:, 2 * hp:3 * hp])
        o_g = jax.nn.sigmoid(gates[:, 3 * hp:4 * hp])
        c_new = f_g * c + i_g * g_g
        h_new = o_g * jnp.tanh(c_new)
        if need_guard:
            valid = (c_idx * tc + tt) < t_valid
            c = jnp.where(valid, c_new, c)
            h = jnp.where(valid, h_new, h)
        else:
            c, h = c_new, h_new
        y_ref[:, tt, :] = h.astype(y_ref.dtype)

    h_s[...] = h
    c_s[...] = c
    hn_ref[...] = h.astype(hn_ref.dtype)       # written every chunk -> always defined
    cn_ref[...] = c.astype(cn_ref.dtype)


# ----------------------------------------------------------------------------
# Wrappers
# ----------------------------------------------------------------------------
def matmul_bias(x, w_t, b, *, compute_dtype=jnp.bfloat16, out_dtype=jnp.float32,
                tm_max=256, tn_max=512):
    """out = x @ w_t + b, tiled over (M, N); M padded to sublanes, N padded to
    128 lanes (lane-dense stores) and sliced back."""
    M, K = x.shape
    _, N = w_t.shape
    tm = min(tm_max, _round_up(M, 8))
    tn = min(tn_max, _round_up(N, 128))
    Mp = _round_up(M, tm)
    Np = _round_up(N, tn)

    xp = x.astype(compute_dtype)
    if Mp != M:
        xp = jnp.pad(xp, ((0, Mp - M), (0, 0)))
    wp = w_t.astype(compute_dtype)
    bp = jnp.asarray(b, jnp.float32).reshape(1, N)
    if Np != N:
        wp = jnp.pad(wp, ((0, 0), (0, Np - N)))
        bp = jnp.pad(bp, ((0, 0), (0, Np - N)))

    out = pl.pallas_call(
        _matmul_bias_kernel,
        out_shape=jax.ShapeDtypeStruct((Mp, Np), out_dtype),
        grid=(Mp // tm, Np // tn),
        in_specs=[
            pl.BlockSpec((tm, K), lambda i, j: (i, 0)),
            pl.BlockSpec((K, tn), lambda i, j: (0, j)),
            pl.BlockSpec((1, tn), lambda i, j: (0, j)),
        ],
        out_specs=pl.BlockSpec((tm, tn), lambda i, j: (i, j)),
        compiler_params=pltpu.CompilerParams(
            dimension_semantics=("parallel", "parallel")),
    )(xp, wp, bp)
    return out[:M, :N]


def _choose_tc(T, B, hp, chunk_budget_bytes=8 * 2 ** 20):
    """Time chunk so double-buffered (gx + y) chunks stay within a VMEM budget."""
    tc = min(T, 16)

    def chunk_bytes(t):
        return 2 * (B * t * 4 * hp * 4 + B * t * hp * 4)

    while tc > 1 and chunk_bytes(tc) > chunk_budget_bytes:
        tc = max(1, tc // 2)
    return tc


def lstm_layer_recurrence(gx, whh_t_pad, h0_pad, c0_pad, *, hp, t_valid, tc,
                          compute_dtype, y_dtype):
    """gx: (B, Tp, 4*hp) f32. Returns (y (B,Tp,hp), h_n (B,hp), c_n (B,hp))."""
    B, Tp, G = gx.shape
    num_chunks = Tp // tc

    gx_block = B * tc * G * 4
    y_block = B * tc * hp * jnp.dtype(y_dtype).itemsize
    whh_bytes = hp * G * jnp.dtype(compute_dtype).itemsize
    est = 2 * gx_block + 2 * y_block + 2 * whh_bytes + 6 * B * hp * 4
    vmem_limit = int(min(48 * 2 ** 20, max(32 * 2 ** 20, 2 * est)))

    kernel = functools.partial(_lstm_rec_kernel, tc=tc, hp=hp,
                               t_valid=t_valid, compute_dtype=compute_dtype)

    grid_spec = pltpu.PrefetchScalarGridSpec(
        num_scalar_prefetch=0,
        grid=(num_chunks,),
        in_specs=[
            pl.BlockSpec((B, tc, G), lambda c: (0, c, 0)),    # gates_x chunk
            pl.BlockSpec((hp, G), lambda c: (0, 0)),          # W_hh^T (resident)
            pl.BlockSpec((B, hp), lambda c: (0, 0)),          # h0
            pl.BlockSpec((B, hp), lambda c: (0, 0)),          # c0
        ],
        out_specs=[
            pl.BlockSpec((B, tc, hp), lambda c: (0, c, 0)),   # y chunk
            pl.BlockSpec((B, hp), lambda c: (0, 0)),          # h_n (revisited)
            pl.BlockSpec((B, hp), lambda c: (0, 0)),          # c_n (revisited)
        ],
        scratch_shapes=[
            pltpu.VMEM((B, hp), jnp.float32),                 # h carry
            pltpu.VMEM((B, hp), jnp.float32),                 # c carry
        ],
    )

    return pl.pallas_call(
        kernel,
        out_shape=(
            jax.ShapeDtypeStruct((B, Tp, hp), y_dtype),
            jax.ShapeDtypeStruct((B, hp), jnp.float32),
            jax.ShapeDtypeStruct((B, hp), jnp.float32),
        ),
        grid_spec=grid_spec,
        compiler_params=pltpu.CompilerParams(
            dimension_semantics=("arbitrary",),
            vmem_limit_bytes=vmem_limit),
    )(gx, whh_t_pad.astype(compute_dtype), h0_pad, c0_pad)


# ----------------------------------------------------------------------------
# Weight layout helpers: gate g -> lane block [g*hp, g*hp + H), padding zero.
# ----------------------------------------------------------------------------
def _pad_gate_cols(w, hp):
    """PyTorch (4H, Din) -> (Din, 4*hp) transposed, gate blocks lane-aligned."""
    four_h, din = w.shape
    h = four_h // 4
    w4 = jnp.transpose(jnp.asarray(w, jnp.float32).reshape(4, h, din), (2, 0, 1))
    out = jnp.zeros((din, 4, hp), jnp.float32).at[:, :, :h].set(w4)
    return out.reshape(din, 4 * hp)


def _pad_gate_bias(b, hp):
    h = b.shape[0] // 4
    b4 = jnp.asarray(b, jnp.float32).reshape(4, h)
    return jnp.zeros((4, hp), jnp.float32).at[:, :h].set(b4).reshape(4 * hp)


def _pad_rows(w_t, rows):
    if w_t.shape[0] == rows:
        return w_t
    return jnp.zeros((rows, w_t.shape[1]), w_t.dtype).at[:w_t.shape[0]].set(w_t)


# ----------------------------------------------------------------------------
# Full forward
# ----------------------------------------------------------------------------
def char_lstm_forward(params, inp, hidden, *, compute_dtype=jnp.bfloat16):
    """inp: (B, T, input_size) batch_first.  hidden = (h0, c0), each
    (num_layers, B, hidden_size).  Returns (output (B*T, input_size), (h_n, c_n))."""
    h0_all, c0_all = hidden
    num_layers = h0_all.shape[0]
    B, T, _ = inp.shape
    H = h0_all.shape[-1]
    Hp = _round_up(H, 128)          # per-gate width padded to 128 lanes

    tc = _choose_tc(T, B, Hp)
    Tp = _round_up(T, tc)
    y_dtype = jnp.float32 if compute_dtype == jnp.float32 else jnp.bfloat16

    x = inp                         # stays batch-first; no transposes anywhere
    h_finals, c_finals = [], []
    for l in range(num_layers):
        lp = params["lstm"][l]
        din = x.shape[-1]
        wih_t = _pad_rows(_pad_gate_cols(lp["w_ih"], Hp), din)    # (din, 4Hp)
        whh_t = _pad_rows(_pad_gate_cols(lp["w_hh"], Hp), Hp)     # (Hp, 4Hp)
        bias = _pad_gate_bias(lp["b_ih"] + lp["b_hh"], Hp)        # (4Hp,)

        # Hoisted input projection: one large MXU matmul over all timesteps.
        tl = x.shape[1]
        gx = matmul_bias(x.reshape(B * tl, din), wih_t, bias,
                         compute_dtype=compute_dtype, out_dtype=jnp.float32)
        gx = gx.reshape(B, tl, 4 * Hp)
        if tl != Tp:
            gx = jnp.pad(gx, ((0, 0), (0, Tp - tl), (0, 0)))

        h0p = jnp.pad(h0_all[l].astype(jnp.float32), ((0, 0), (0, Hp - H)))
        c0p = jnp.pad(c0_all[l].astype(jnp.float32), ((0, 0), (0, Hp - H)))

        # Chunked sequential recurrence: per step only h @ W_hh + gates_x[t].
        y, h_n, c_n = lstm_layer_recurrence(
            gx, whh_t, h0p, c0p, hp=Hp, t_valid=T, tc=tc,
            compute_dtype=compute_dtype, y_dtype=y_dtype)
        h_finals.append(h_n[:, :H])
        c_finals.append(c_n[:, :H])
        x = y                        # (B, Tp, Hp); padded lanes are exactly zero
        # TODO(synk): training-mode inter-layer dropout(p=0.5) omitted (eval semantics).

    y2 = x[:, :T, :].reshape(B * T, Hp)
    w_lin_t = _pad_rows(jnp.asarray(params["linear"]["w"], jnp.float32).T, Hp)
    out = matmul_bias(y2, w_lin_t, params["linear"]["b"],
                      compute_dtype=compute_dtype, out_dtype=jnp.float32)
    return out, (jnp.stack(h_finals, 0), jnp.stack(c_finals, 0))


# ----------------------------------------------------------------------------
# Deterministic parameter init (shapes follow nn.LSTM / nn.Linear)
# ----------------------------------------------------------------------------
def init_params(key, input_size, hidden_size, num_layers):
    params = {"lstm": [], "linear": {}}
    k = 1.0 / jnp.sqrt(hidden_size)
    for l in range(num_layers):
        din = input_size if l == 0 else hidden_size
        key, k1, k2, k3, k4 = jax.random.split(key, 5)
        params["lstm"].append({
            "w_ih": jax.random.uniform(k1, (4 * hidden_size, din),
                                       jnp.float32, -k, k),
            "w_hh": jax.random.uniform(k2, (4 * hidden_size, hidden_size),
                                       jnp.float32, -k, k),
            "b_ih": jax.random.uniform(k3, (4 * hidden_size,),
                                       jnp.float32, -k, k),
            "b_hh": jax.random.uniform(k4, (4 * hidden_size,),
                                       jnp.float32, -k, k),
        })
    key, k1, k2 = jax.random.split(key, 3)
    params["linear"]["w"] = jax.random.uniform(
        k1, (input_size, hidden_size), jnp.float32, -k, k)
    params["linear"]["b"] = jax.random.uniform(
        k2, (input_size,), jnp.float32, -k, k)
    return params


# ----------------------------------------------------------------------------
# Pure-JAX reference (for correctness check)
# ----------------------------------------------------------------------------
def _ref_forward(params, inp, hidden):
    h0_all, c0_all = hidden
    x = inp
    hs, cs = [], []
    for l, lp in enumerate(params["lstm"]):
        h, c = h0_all[l], c0_all[l]
        outs = []
        for t in range(x.shape[1]):
            g = x[:, t] @ lp["w_ih"].T + lp["b_ih"] + h @ lp["w_hh"].T + lp["b_hh"]
            H = h.shape[-1]
            i = jax.nn.sigmoid(g[:, :H])
            f = jax.nn.sigmoid(g[:, H:2 * H])
            gg = jnp.tanh(g[:, 2 * H:3 * H])
            o = jax.nn.sigmoid(g[:, 3 * H:])
            c = f * c + i * gg
            h = o * jnp.tanh(c)
            outs.append(h)
        x = jnp.stack(outs, axis=1)
        hs.append(h)
        cs.append(c)
    y = x.reshape(-1, x.shape[-1])
    out = y @ params["linear"]["w"].T + params["linear"]["b"]
    return out, (jnp.stack(hs, 0), jnp.stack(cs, 0))


# ----------------------------------------------------------------------------
if __name__ == "__main__":
    input_size, hidden_size, num_layers = 16, 32, 2
    B, T = 2, 8

    key = jax.random.PRNGKey(0)
    key, kp, kx = jax.random.split(key, 3)
    params = init_params(kp, input_size, hidden_size, num_layers)
    x = jax.random.normal(kx, (B, T, input_size), jnp.float32)
    h0 = jnp.zeros((num_layers, B, hidden_size), jnp.float32)   # init_hidden
    c0 = jnp.zeros((num_layers, B, hidden_size), jnp.float32)

    ref_out, (ref_h, ref_c) = _ref_forward(params, x, (h0, c0))

    # f32 compute path: exact parity with the f32 reference.
    out32, (h32, c32) = char_lstm_forward(params, x, (h0, c0),
                                          compute_dtype=jnp.float32)
    jax.block_until_ready(out32)
    assert out32.shape == (B * T, input_size)
    assert h32.shape == (num_layers, B, hidden_size)
    assert c32.shape == (num_layers, B, hidden_size)
    assert jnp.allclose(out32, ref_out, atol=2e-4, rtol=2e-4)
    assert jnp.allclose(h32, ref_h, atol=2e-4, rtol=2e-4)
    assert jnp.allclose(c32, ref_c, atol=2e-4, rtol=2e-4)

    # Default bf16-matmul path (MXU-friendly on v6e/v7x); f32 gate math + accum.
    out_bf, (h_bf, c_bf) = char_lstm_forward(params, x, (h0, c0))
    jax.block_until_ready(out_bf)
    assert out_bf.shape == (B * T, input_size)
    assert jnp.allclose(out_bf, ref_out, atol=6e-2, rtol=6e-2)
    assert jnp.allclose(h_bf, ref_h, atol=6e-2, rtol=6e-2)
    assert jnp.allclose(c_bf, ref_c, atol=6e-2, rtol=6e-2)

    print("KERNEL_OK")
</pallas_src>

<mosaic_0001>
module attributes {stable_mosaic.version = 11 : i64} {
  func.func @_matmul_bias_kernel(%arg0: i32, %arg1: i32, %arg2: memref<16x16xf32, #tpu.memory_space<vmem>>, %arg3: memref<16x512xf32, #tpu.memory_space<vmem>>, %arg4: memref<1x512xf32, #tpu.memory_space<vmem>>, %arg5: memref<16x512xf32, #tpu.memory_space<vmem>>) attributes {dimension_semantics = [#tpu.dimension_semantics<parallel>, #tpu.dimension_semantics<parallel>], iteration_bounds = array<i64: 1, 1>, scalar_prefetch = 0 : i64, scratch_operands = 0 : i64, tpu.core_type = #tpu.core_type<tc>, window_params = [{transform_indices = @transform_0, window_bounds = array<i64: 16, 16>}, {transform_indices = @transform_1, window_bounds = array<i64: 16, 512>}, {transform_indices = @transform_2, window_bounds = array<i64: 1, 512>}, {transform_indices = @transform_3, window_bounds = array<i64: 16, 512>}]} {
    %c0 = arith.constant 0 : index
    %c0_0 = arith.constant 0 : index
    %0 = vector.load %arg2[%c0, %c0_0] : memref<16x16xf32, #tpu.memory_space<vmem>>, vector<16x16xf32>
    %c0_1 = arith.constant 0 : index
    %c0_2 = arith.constant 0 : index
    %1 = vector.load %arg3[%c0_1, %c0_2] : memref<16x512xf32, #tpu.memory_space<vmem>>, vector<16x512xf32>
    %cst = arith.constant dense<0.000000e+00> : vector<16x512xf32>
    %2 = tpu.matmul %0, %1, %cst {dimension_numbers = #tpu.dot_dimension_numbers<[1], [0], [0], [1], [0, 0, 1, 1], [], []>} : vector<16x16xf32>, vector<16x512xf32>, vector<16x512xf32> -> vector<16x512xf32>
    %c0_3 = arith.constant 0 : index
    %c0_4 = arith.constant 0 : index
    %3 = vector.load %arg4[%c0_3, %c0_4] : memref<1x512xf32, #tpu.memory_space<vmem>>, vector<1x512xf32>
    %4 = vector.broadcast %3 : vector<1x512xf32> to vector<16x512xf32>
    %5 = arith.addf %2, %4 : vector<16x512xf32>
    %c0_5 = arith.constant 0 : index
    %c0_6 = arith.constant 0 : index
    %6 = vector.load %arg5[%c0_5, %c0_6] : memref<16x512xf32, #tpu.memory_space<vmem>>, vector<16x512xf32>
    tpu.vector_store %arg5[%c0_5, %c0_6], %5 {strides = array<i32>} : memref<16x512xf32, #tpu.memory_space<vmem>>, vector<16x512xf32>,
    return
  }
  func.func @transform_0(%arg0: i32, %arg1: i32) -> (i32, i32) {
    %c0_i32 = arith.constant 0 : i32
    %c0_i32_0 = arith.constant 0 : i32
    return %arg0, %c0_i32 : i32, i32
  }
  func.func @transform_1(%arg0: i32, %arg1: i32) -> (i32, i32) {
    %c0_i32 = arith.constant 0 : i32
    %c0_i32_0 = arith.constant 0 : i32
    return %c0_i32, %arg1 : i32, i32
  }
  func.func @transform_2(%arg0: i32, %arg1: i32) -> (i32, i32) {
    %c0_i32 = arith.constant 0 : i32
    %c0_i32_0 = arith.constant 0 : i32
    return %c0_i32, %arg1 : i32, i32
  }
  func.func @transform_3(%arg0: i32, %arg1: i32) -> (i32, i32) {
    %c0_i32 = arith.constant 0 : i32
    return %arg0, %arg1 : i32, i32
  }
}

</mosaic_0001>

<llo_original>
// kernel: tpu_custom_call.1
$region0: #{tpu_custom_call.1}
  #allocation0 [shape = 'u32[]', space=smem, size = 0x4, offset = 0x4, fixed_abs, tag = 'smem constant byte address 0x4 - core index']
  #allocation1 [shape = 'u32[144,128]{1,0:T(1,128)}', space=vmem, size = 0x12000, scoped, tag = 'internal scratch']
  %s0 = inlined_call_operand.hbm [shape: f32[16,16], index: 0, kind: input, shape index: {}]
  %s1 = inlined_call_operand.hbm [shape: f32[16,512], index: 1, kind: input, shape index: {}]
  %s2 = inlined_call_operand.vmem [shape: f32[1,512], index: 2, kind: input, shape index: {}]
  %s3 = inlined_call_operand.hbm [shape: f32[16,512], index: 3, kind: output, shape index: {}]
  %s4 = sld [smem:[#allocation0]]
  $region30: #{tpu_custom_call.1} parent=0
    _
  %s6 = ssub.s32 1, %s4
  %s7 = scalar_select 0, %s6, %s4
  $region1: #{tpu_custom_call.1} parent=0
    #allocation2 [shape = 'u8[8192]{0}', space=vmem, size = 0x2000, scoped, tag = 'input window, operand 0, single buffered']
    #allocation3 [shape = 's32[1]{0}', space=sflag, size = 0x4, scoped, tag = 'scoped memory for tpu_custom_call.1']
    #allocation4 [shape = 's32[1]{0}', space=sflag, size = 0x4, scoped, tag = 'scoped memory for tpu_custom_call.1']
    #allocation5 [shape = 'u8[32768]{0}', space=vmem, size = 0x8000, scoped, tag = 'input window, operand 1, single buffered']
    #allocation6 [shape = 's32[1]{0}', space=sflag, size = 0x4, scoped, tag = 'scoped memory for tpu_custom_call.1']
    #allocation7 [shape = 'u8[32768]{0}', space=vmem, size = 0x8000, scoped, tag = 'output window, operand 0, single buffered']
    %8 = vsyncpa [#allocation3], 0
    %9 = vsyncpa [#allocation6], 0
    %10 = vsyncpa [#allocation4], 0
    // Predicated region
    $region2: #{tpu_custom_call.1} parent=1 // pred_check
      _
    $region3: #{tpu_custom_call.1} parent=1 // pred_check_branch
      %12 = sbr.rel (0) target = $region5
    $region4: #{tpu_custom_call.1} parent=1 // pred_region
      %s14 = ssub.s32 256, 256
      %15 = vsyncadd [#allocation3], %s14
      %s16 = sshll.u32 [#allocation2], 4
      %s17 = int_to_ptr.vmem [resolvable:$true] %s16
      %22 = dma.hbm_to_vmem [thread:$0]  %s0, 256, %s17, [#allocation3], 128, 128, 8
    $region5: #{tpu_custom_call.1} parent=1 // pred_fallthru
      _
    // Predicated region
    $region6: #{tpu_custom_call.1} parent=1 // pred_check
      _
    $region7: #{tpu_custom_call.1} parent=1 // pred_check_branch
      %24 = sbr.rel (0) target = $region9
    $region8: #{tpu_custom_call.1} parent=1 // pred_region
      %s26 = ssub.s32 1024, 1024
      %27 = vsyncadd [#allocation6], %s26
      %s28 = sshll.u32 [#allocation5], 4
      %s29 = int_to_ptr.vmem [resolvable:$true] %s28
      %34 = dma.hbm_to_vmem [thread:$0]  %s1, 1024, %s29, [#allocation6], 512, 512, 32
    $region9: #{tpu_custom_call.1} parent=1 // pred_fallthru
      _
    // Predicated region
    $region10: #{tpu_custom_call.1} parent=1 // pred_check
      _
    $region11: #{tpu_custom_call.1} parent=1 // pred_check_branch
      %36 = sbr.rel (0) target = $region13
    $region12: #{tpu_custom_call.1} parent=1 // pred_region
      _
    $region13: #{tpu_custom_call.1} parent=1 // pred_fallthru
      _
    // Predicated region
    $region14: #{tpu_custom_call.1} parent=1 // pred_check
      _
    $region15: #{tpu_custom_call.1} parent=1 // pred_check_branch
      %38 = sbr.rel (0) target = $region17
    $region16: #{tpu_custom_call.1} parent=1 // pred_region
      %39 = dma.done [#allocation3], 256
    $region17: #{tpu_custom_call.1} parent=1 // pred_fallthru
      _
    // Predicated region
    $region18: #{tpu_custom_call.1} parent=1 // pred_check
      _
    $region19: #{tpu_custom_call.1} parent=1 // pred_check_branch
      %41 = sbr.rel (0) target = $region21
    $region20: #{tpu_custom_call.1} parent=1 // pred_region
      %42 = dma.done [#allocation6], 1024
    $region21: #{tpu_custom_call.1} parent=1 // pred_fallthru
      _
    %v43 = vld [vmem:[#allocation2] sm:$0xff]
    %v44 = vld [vmem:[#allocation2 + $0x8] sm:$0xff]
    %v45 = vld [vmem:[#allocation5] sm:$0xff]
    %v46 = vld [vmem:[#allocation5 + $0x8] sm:$0xff]
    %v47 = vld [vmem:[#allocation5 + $0x10] sm:$0xff]
    %v48 = vld [vmem:[#allocation5 + $0x18] sm:$0xff]
    %v49 = vld [vmem:[#allocation5 + $0x20] sm:$0xff]
    %v50 = vld [vmem:[#allocation5 + $0x28] sm:$0xff]
    %v51 = vld [vmem:[#allocation5 + $0x30] sm:$0xff]
    %v52 = vld [vmem:[#allocation5 + $0x38] sm:$0xff]
    %v53 = vld [vmem:[%s2] sm:$0xf]
    %v55 = vlaneseq
    %v56 = vshrl.u32 %v55, 7
    %v57 = vsub.s32 0, %v56
    %v58 = vrot.slane %v53, %v57
    %v59 = vlaneseq
    %v60 = vshrl.u32 %v59, 7
    %v61 = vsub.s32 1, %v60
    %v62 = vrot.slane %v53, %v61
    %v63 = vlaneseq
    %v64 = vshrl.u32 %v63, 7
    %v65 = vsub.s32 2, %v64
    %v66 = vrot.slane %v53, %v65
    %v67 = vlaneseq
    %v68 = vshrl.u32 %v67, 7
    %v69 = vsub.s32 3, %v68
    %v70 = vrot.slane %v53, %v69
    %vm75 = vcmask 130048
    %v77 = vsel %vm75, %v43, 0
    %v80 = vsel %vm75, %v44, 0
    %82 = vmatprep.subr.mxu0 %v46
    %83 = vmatpush1.msra.mxu0 %v45
    %84 = vmatprep.subr.mxu0 %v50
    %85 = vmatpush1.msra.mxu0 %v49
    %86 = vmatprep.subr.mxu0 0.0
    %87 = vmatpush1.msra.mxu0 0.0
    %88 = vmatprep.subr.mxu0 0.0
    %89 = vmatpush1.msra.mxu0 0.0
    %90 = vmatprep.subr.mxu0 0.0
    %91 = vmatpush1.msra.mxu0 0.0
    %92 = vmatprep.subr.mxu0 0.0
    %93 = vmatpush1.msra.mxu0 0.0
    %94 = vmatprep.subr.mxu0 0.0
    %95 = vmatpush1.msra.mxu0 0.0
    %96 = vmatprep.subr.mxu0 0.0
    %97 = vmatpush1.msra.mxu0 0.0
    %98 = vmatprep.subr.mxu0 0.0
    %99 = vmatpush1.msra.mxu0 0.0
    %100 = vmatprep.subr.mxu0 0.0
    %101 = vmatpush1.msra.mxu0 0.0
    %102 = vmatprep.subr.mxu0 0.0
    %103 = vmatpush1.msra.mxu0 0.0
    %104 = vmatprep.subr.mxu0 0.0
    %105 = vmatpush1.msra.mxu0 0.0
    %106 = vmatprep.subr.mxu0 0.0
    %107 = vmatpush1.msra.mxu0 0.0
    %108 = vmatprep.subr.mxu0 0.0
    %109 = vmatpush1.msra.mxu0 0.0
    %110 = vmatprep.subr.mxu0 0.0
    %111 = vmatpush1.msra.mxu0 0.0
    %112 = vmatprep.subr.mxu0 0.0
    %113 = vmatpush1.msra.mxu0 0.0
    %114 = vmatprep.subr.mxu0 0.0
    %115 = vmatpush1.msra.mxu0 0.0
    %116 = vmatprep.subr.mxu0 0.0
    %117 = vmatpush1.msra.mxu0 0.0
    %118 = vmatprep.subr.mxu0 0.0
    %119 = vmatpush1.msra.mxu0 0.0
    %120 = vmatprep.subr.mxu0 0.0
    %121 = vmatpush1.msra.mxu0 0.0
    %122 = vmatprep.subr.mxu0 0.0
    %123 = vmatpush1.msra.mxu0 0.0
    %124 = vmatprep.subr.mxu0 0.0
    %125 = vmatpush1.msra.mxu0 0.0
    %126 = vmatprep.subr.mxu0 0.0
    %127 = vmatpush1.msra.mxu0 0.0
    %128 = vmatprep.subr.mxu0 0.0
    %129 = vmatpush1.msra.mxu0 0.0
    %130 = vmatprep.subr.mxu0 0.0
    %131 = vmatpush1.msra.mxu0 0.0
    %132 = vmatprep.subr.mxu0 0.0
    %133 = vmatpush1.msra.mxu0 0.0
    %134 = vmatprep.subr.mxu0 0.0
    %135 = vmatpush1.msra.mxu0 0.0
    %136 = vmatprep.subr.mxu0 0.0
    %137 = vmatpush1.msra.mxu0 0.0
    %138 = vmatprep.subr.mxu0 0.0
    %139 = vmatpush1.msra.mxu0 0.0
    %140 = vmatprep.subr.mxu0 0.0
    %141 = vmatpush1.msra.mxu0 0.0
    %142 = vmatprep.subr.mxu0 0.0
    %143 = vmatpush1.msra.mxu0 0.0
    %144 = vmatprep.subr.mxu0 0.0
    %145 = vmatpush1.msra.mxu0 0.0
    %146 = vmatprep.mubr.f32.mxu0 0.0
    %147 = vmatmul.mubr.f32.gmra.mrb[0].mxu0 %v77
    %v148 = vpop.f32.mrb[0].mxu0
    %v149 = vadd.f32 %v58, %v148
    %v150 = vpop.f32.mrb[0].mxu0
    %v151 = vadd.f32 %v62, %v150
    %152 = vmatprep.mubr.f32.mxu0 0.0
    %153 = vmatmul.mubr.f32.gmra.mrb[0].mxu0 %v80
    %v154 = vpop.f32.mrb[0].mxu0
    %v155 = vadd.f32 %v58, %v154
    %v156 = vpop.f32.mrb[0].mxu0
    %v157 = vadd.f32 %v62, %v156
    %158 = vdwg.mxu0
    %159 = vmatprep.subr.mxu0 %v48
    %160 = vmatpush1.msra.mxu0 %v47
    %161 = vmatprep.subr.mxu0 %v52
    %162 = vmatpush1.msra.mxu0 %v51
    %163 = vmatprep.subr.mxu0 0.0
    %164 = vmatpush1.msra.mxu0 0.0
    %165 = vmatprep.subr.mxu0 0.0
    %166 = vmatpush1.msra.mxu0 0.0
    %167 = vmatprep.subr.mxu0 0.0
    %168 = vmatpush1.msra.mxu0 0.0
    %169 = vmatprep.subr.mxu0 0.0
    %170 = vmatpush1.msra.mxu0 0.0
    %171 = vmatprep.subr.mxu0 0.0
    %172 = vmatpush1.msra.mxu0 0.0
    %173 = vmatprep.subr.mxu0 0.0
    %174 = vmatpush1.msra.mxu0 0.0
    %175 = vmatprep.subr.mxu0 0.0
    %176 = vmatpush1.msra.mxu0 0.0
    %177 = vmatprep.subr.mxu0 0.0
    %178 = vmatpush1.msra.mxu0 0.0
    %179 = vmatprep.subr.mxu0 0.0
    %180 = vmatpush1.msra.mxu0 0.0
    %181 = vmatprep.subr.mxu0 0.0
    %182 = vmatpush1.msra.mxu0 0.0
    %183 = vmatprep.subr.mxu0 0.0
    %184 = vmatpush1.msra.mxu0 0.0
    %185 = vmatprep.subr.mxu0 0.0
    %186 = vmatpush1.msra.mxu0 0.0
    %187 = vmatprep.subr.mxu0 0.0
    %188 = vmatpush1.msra.mxu0 0.0
    %189 = vmatprep.subr.mxu0 0.0
    %190 = vmatpush1.msra.mxu0 0.0
    %191 = vmatprep.subr.mxu0 0.0
    %192 = vmatpush1.msra.mxu0 0.0
    %193 = vmatprep.subr.mxu0 0.0
    %194 = vmatpush1.msra.mxu0 0.0
    %195 = vmatprep.subr.mxu0 0.0
    %196 = vmatpush1.msra.mxu0 0.0
    %197 = vmatprep.subr.mxu0 0.0
    %198 = vmatpush1.msra.mxu0 0.0
    %199 = vmatprep.subr.mxu0 0.0
    %200 = vmatpush1.msra.mxu0 0.0
    %201 = vmatprep.subr.mxu0 0.0
    %202 = vmatpush1.msra.mxu0 0.0
    %203 = vmatprep.subr.mxu0 0.0
    %204 = vmatpush1.msra.mxu0 0.0
    %205 = vmatprep.subr.mxu0 0.0
    %206 = vmatpush1.msra.mxu0 0.0
    %207 = vmatprep.subr.mxu0 0.0
    %208 = vmatpush1.msra.mxu0 0.0
    %209 = vmatprep.subr.mxu0 0.0
    %210 = vmatpush1.msra.mxu0 0.0
    %211 = vmatprep.subr.mxu0 0.0
    %212 = vmatpush1.msra.mxu0 0.0
    %213 = vmatprep.subr.mxu0 0.0
    %214 = vmatpush1.msra.mxu0 0.0
    %215 = vmatprep.subr.mxu0 0.0
    %216 = vmatpush1.msra.mxu0 0.0
    %217 = vmatprep.subr.mxu0 0.0
    %218 = vmatpush1.msra.mxu0 0.0
    %219 = vmatprep.subr.mxu0 0.0
    %220 = vmatpush1.msra.mxu0 0.0
    %221 = vmatprep.subr.mxu0 0.0
    %222 = vmatpush1.msra.mxu0 0.0
    %223 = vmatprep.mubr.f32.mxu0 0.0
    %224 = vmatmul.mubr.f32.gmra.mrb[0].mxu0 %v77
    %v225 = vpop.f32.mrb[0].mxu0
    %v226 = vadd.f32 %v66, %v225
    %v227 = vpop.f32.mrb[0].mxu0
    %v228 = vadd.f32 %v70, %v227
    %229 = vmatprep.mubr.f32.mxu0 0.0
    %230 = vmatmul.mubr.f32.gmra.mrb[0].mxu0 %v80
    %v231 = vpop.f32.mrb[0].mxu0
    %v232 = vadd.f32 %v66, %v231
    %v233 = vpop.f32.mrb[0].mxu0
    %v234 = vadd.f32 %v70, %v233
    %235 = vdwg.mxu0
    %236 = vst [vmem:[#allocation7] sm:$0xff] %v149
    %237 = vst [vmem:[#allocation7 + $0x8] sm:$0xff] %v151
    %238 = vst [vmem:[#allocation7 + $0x10] sm:$0xff] %v226
    %239 = vst [vmem:[#allocation7 + $0x18] sm:$0xff] %v228
    %240 = vst [vmem:[#allocation7 + $0x20] sm:$0xff] %v155
    %241 = vst [vmem:[#allocation7 + $0x28] sm:$0xff] %v157
    %242 = vst [vmem:[#allocation7 + $0x30] sm:$0xff] %v232
    %243 = vst [vmem:[#allocation7 + $0x38] sm:$0xff] %v234
    // Predicated region
    $region22: #{tpu_custom_call.1} parent=1 // pred_check
      _
    $region23: #{tpu_custom_call.1} parent=1 // pred_check_branch
      %245 = sbr.rel (0) target = $region25
    $region24: #{tpu_custom_call.1} parent=1 // pred_region
      %s247 = ssub.s32 1024, 1024
      %248 = vsyncadd [#allocation4], %s247
      %s249 = sshll.u32 [#allocation7], 4
      %s250 = int_to_ptr.vmem [resolvable:$true] %s249
      %255 = dma.vmem_to_hbm [thread:$0]  %s250, 1024, %s3, [#allocation4], 512, 512, 32
    $region25: #{tpu_custom_call.1} parent=1 // pred_fallthru
      _
    // Predicated region
    $region26: #{tpu_custom_call.1} parent=1 // pred_check
      _
    $region27: #{tpu_custom_call.1} parent=1 // pred_check_branch
      %257 = sbr.rel (0) target = $region29
    $region28: #{tpu_custom_call.1} parent=1 // pred_region
      %258 = dma.done [#allocation4], 1024
    $region29: #{tpu_custom_call.1} parent=1 // pred_fallthru
      _
    %259 = vsyncpa [#allocation3], 1
    %260 = vsyncpa [#allocation6], 1
    %261 = vsyncpa [#allocation4], 1

</llo_original>
